<compile_context>
chip_gen: v7x
topology: tpu7x:2x2x1
jax: 0.10.0
libtpu: 0.0.40
codegen_flags: <defaults>
</compile_context>

<pallas_src>
import functools

import jax
import jax.numpy as jnp
from jax import lax
from jax.experimental import pallas as pl
from jax.experimental.pallas import tpu as pltpu

_LANE = 128
_MIN_TILE = 512  # floor: >= 2 KiB per-channel strided DMA rows at f32


def _layernorm2d_kernel(x_ref, gamma_ref, beta_ref, o_ref, *, eps, inv_c):
    # x_ref: (1, C, T) — C on sublanes, spatial positions on lanes.
    # gamma_ref / beta_ref: (1, C, 1), already float32.
    x = x_ref[...].astype(jnp.float32)

    # One traversal of the tile: accumulate sum(x) and sum(x*x) together.
    s1 = jnp.sum(x, axis=1, keepdims=True)           # (1, 1, T)
    s2 = jnp.sum(x * x, axis=1, keepdims=True)        # (1, 1, T)
    mean = s1 * inv_c
    # Biased variance via E[x^2] - E[x]^2 (f32 accumulation).  Clamp at 0 to
    # guard the mild cancellation risk for heavily offset activations.
    var = jnp.maximum(s2 * inv_c - mean * mean, 0.0)
    inv = lax.rsqrt(var + eps)                        # (1, 1, T)

    g = gamma_ref[...]                                # (1, C, 1)
    b = beta_ref[...]
    # y = (x - mean) * inv * gamma + beta — written directly to the output,
    # no extra full-tile temp materialized between stats and normalization.
    o_ref[...] = (((x - mean) * inv) * g + b).astype(o_ref.dtype)


def _round_up(v, m):
    return ((v + m - 1) // m) * m


def _tpu_block_profile():
    """(target_block_bytes, vmem_limit_bytes) per TPU generation.

    v7x has only 64 MiB VMEM per TensorCore -> ~2 MiB blocks, 32 MiB scoped.
    v5e / v6e have 128 MiB physical VMEM -> ~4 MiB blocks, 64 MiB scoped.
    """
    vmem_bytes = None
    try:
        vmem_bytes = int(pltpu.get_tpu_info().vmem_capacity_bytes)
    except Exception:
        vmem_bytes = None
    if vmem_bytes is None:
        try:
            kind = jax.devices()[0].device_kind.lower()
        except Exception:
            kind = ""
        if "v5" in kind or "v6" in kind:
            vmem_bytes = 128 << 20
        else:
            vmem_bytes = 64 << 20      # conservative (v7x-class) default
    if vmem_bytes <= (96 << 20):
        return (2 << 20), (32 << 20)   # v7x-class
    return (4 << 20), (64 << 20)       # v5e / v6e


def _choose_tile_hw(HW, C, itemsize, target_block_bytes):
    """Lane tile: multiple of 128, ~target_block_bytes of input, >= _MIN_TILE
    (so each channel's strided DMA row is >= ~2 KiB), dividing HW when
    possible; otherwise near-equal 128-multiples (balanced masked tail)."""
    max_t = (target_block_bytes // max(1, C * itemsize)) // _LANE * _LANE
    max_t = max(_MIN_TILE, max_t, _LANE)
    if HW <= max_t:
        return HW                      # full spatial extent — always legal
    # Largest multiple of 128 <= max_t that evenly divides HW (lane-dense, no tail).
    t = max_t
    while t >= _LANE:
        if HW % t == 0:
            return t
        t -= _LANE
    # No even divisor: split into near-equal 128-multiples so the masked tail
    # block is close in size to the full blocks (keeps v7x's 2 TCs balanced).
    num = pl.cdiv(HW, max_t)
    return min(max_t, _round_up(pl.cdiv(HW, num), _LANE))


def layernorm2d(x_nchw, gamma, beta, *, eps=1e-6,
                target_block_bytes=None, vmem_limit_bytes=None):
    """LayerNorm over the channel dim of an NCHW tensor (PyTorch LayerNorm2d)."""
    N, C, H, W = x_nchw.shape
    HW = H * W
    itemsize = jnp.dtype(x_nchw.dtype).itemsize

    auto_block, auto_vmem = _tpu_block_profile()
    if target_block_bytes is None:
        target_block_bytes = auto_block
    if vmem_limit_bytes is None:
        vmem_limit_bytes = auto_vmem

    # NCHW is contiguous as (N, C, H*W): this reshape is layout-free (no copy).
    x3 = x_nchw.reshape(N, C, HW)

    # TODO(synk): HW < 128 (e.g. 7x7 late ConvNeXt stages) still hits masked
    # lane-sparse stores; a lane-packing path (folding N into the lane axis)
    # would recover ~2-3x for that regime.
    tile = _choose_tile_hw(HW, C, itemsize, target_block_bytes)
    num_tiles = pl.cdiv(HW, tile)
    grid = (N, num_tiles)

    gamma3 = gamma.astype(jnp.float32).reshape(1, C, 1)
    beta3 = beta.astype(jnp.float32).reshape(1, C, 1)

    kernel = functools.partial(_layernorm2d_kernel, eps=eps, inv_c=1.0 / C)

    cost = pl.CostEstimate(
        flops=8 * N * C * HW,
        transcendentals=N * HW,
        bytes_accessed=2 * N * C * HW * itemsize + 2 * C * 4,
    )

    out3 = pl.pallas_call(
        kernel,
        out_shape=jax.ShapeDtypeStruct((N, C, HW), x_nchw.dtype),
        grid_spec=pltpu.PrefetchScalarGridSpec(
            num_scalar_prefetch=0,
            grid=grid,
            in_specs=[
                pl.BlockSpec((1, C, tile), lambda n, s: (n, 0, s)),
                pl.BlockSpec((1, C, 1), lambda n, s: (0, 0, 0)),   # gamma (resident)
                pl.BlockSpec((1, C, 1), lambda n, s: (0, 0, 0)),   # beta  (resident)
            ],
            out_specs=pl.BlockSpec((1, C, tile), lambda n, s: (n, 0, s)),
        ),
        compiler_params=pltpu.CompilerParams(
            dimension_semantics=("parallel", "parallel"),
            vmem_limit_bytes=vmem_limit_bytes,
        ),
        cost_estimate=cost,
    )(x3, gamma3, beta3)

    return out3.reshape(N, C, H, W)


def _reference_layernorm2d(x_nchw, gamma, beta, eps=1e-6):
    x = jnp.transpose(x_nchw, (0, 2, 3, 1)).astype(jnp.float32)
    mean = jnp.mean(x, axis=-1, keepdims=True)
    var = jnp.mean((x - mean) ** 2, axis=-1, keepdims=True)
    y = (x - mean) / jnp.sqrt(var + eps) * gamma + beta
    return jnp.transpose(y, (0, 3, 1, 2)).astype(x_nchw.dtype)


if __name__ == "__main__":
    key = jax.random.PRNGKey(0)
    kx, kg, kb, kx2, kg2, kb2 = jax.random.split(key, 6)

    # Primary small shape.
    N, C, H, W = 2, 4, 16, 16
    x = jax.random.normal(kx, (N, C, H, W), dtype=jnp.float32)
    gamma = 1.0 + 0.1 * jax.random.normal(kg, (C,), dtype=jnp.float32)
    beta = 0.1 * jax.random.normal(kb, (C,), dtype=jnp.float32)

    out = layernorm2d(x, gamma, beta, eps=1e-6)
    out = jax.block_until_ready(out)
    ref = _reference_layernorm2d(x, gamma, beta, eps=1e-6)
    assert out.shape == (N, C, H, W)
    assert jnp.allclose(out, ref, atol=1e-5, rtol=1e-5), "mismatch vs reference"

    # Second small shape exercising a non-128-multiple spatial extent (7x7).
    N2, C2, H2, W2 = 2, 8, 7, 7
    x2 = jax.random.normal(kx2, (N2, C2, H2, W2), dtype=jnp.float32)
    gamma2 = 1.0 + 0.1 * jax.random.normal(kg2, (C2,), dtype=jnp.float32)
    beta2 = 0.1 * jax.random.normal(kb2, (C2,), dtype=jnp.float32)

    out2 = layernorm2d(x2, gamma2, beta2, eps=1e-6)
    out2 = jax.block_until_ready(out2)
    ref2 = _reference_layernorm2d(x2, gamma2, beta2, eps=1e-6)
    assert out2.shape == (N2, C2, H2, W2)
    assert jnp.allclose(out2, ref2, atol=1e-5, rtol=1e-5), "mismatch vs reference (7x7)"

    print("KERNEL_OK")
</pallas_src>

<mosaic_0001>
module attributes {stable_mosaic.version = 11 : i64} {
  func.func @_layernorm2d_kernel(%arg0: i32, %arg1: i32, %arg2: memref<1x4x256xf32, #tpu.memory_space<vmem>>, %arg3: memref<1x4x1xf32, #tpu.memory_space<vmem>>, %arg4: memref<1x4x1xf32, #tpu.memory_space<vmem>>, %arg5: memref<1x4x256xf32, #tpu.memory_space<vmem>>) attributes {dimension_semantics = [#tpu.dimension_semantics<parallel>, #tpu.dimension_semantics<parallel>], iteration_bounds = array<i64: 2, 1>, scalar_prefetch = 0 : i64, scratch_operands = 0 : i64, tpu.core_type = #tpu.core_type<tc>, window_params = [{transform_indices = @transform_0, window_bounds = array<i64: 1, 4, 256>}, {pipeline_mode = #tpu.pipeline_mode<synchronous>, transform_indices = @transform_1, window_bounds = array<i64: 1, 4, 1>}, {pipeline_mode = #tpu.pipeline_mode<synchronous>, transform_indices = @transform_2, window_bounds = array<i64: 1, 4, 1>}, {transform_indices = @transform_3, window_bounds = array<i64: 1, 4, 256>}]} {
    %c0 = arith.constant 0 : index
    %c0_0 = arith.constant 0 : index
    %c0_1 = arith.constant 0 : index
    %0 = vector.load %arg2[%c0, %c0_0, %c0_1] : memref<1x4x256xf32, #tpu.memory_space<vmem>>, vector<1x4x256xf32>
    %cst = arith.constant dense<0.000000e+00> : vector<1x256xf32>
    %1 = vector.multi_reduction <add>, %0, %cst [1] : vector<1x4x256xf32> to vector<1x256xf32>
    %2 = vector.shape_cast %1 : vector<1x256xf32> to vector<1x1x256xf32>
    %3 = arith.mulf %0, %0 : vector<1x4x256xf32>
    %cst_2 = arith.constant dense<0.000000e+00> : vector<1x256xf32>
    %4 = vector.multi_reduction <add>, %3, %cst_2 [1] : vector<1x4x256xf32> to vector<1x256xf32>
    %5 = vector.shape_cast %4 : vector<1x256xf32> to vector<1x1x256xf32>
    %cst_3 = arith.constant 2.500000e-01 : f32
    %6 = vector.broadcast %cst_3 : f32 to vector<1x1x256xf32>
    %7 = arith.mulf %2, %6 : vector<1x1x256xf32>
    %cst_4 = arith.constant 2.500000e-01 : f32
    %8 = vector.broadcast %cst_4 : f32 to vector<1x1x256xf32>
    %9 = arith.mulf %5, %8 : vector<1x1x256xf32>
    %10 = arith.mulf %7, %7 : vector<1x1x256xf32>
    %11 = arith.subf %9, %10 : vector<1x1x256xf32>
    %cst_5 = arith.constant 0.000000e+00 : f32
    %12 = vector.broadcast %cst_5 : f32 to vector<1x1x256xf32>
    %13 = arith.maximumf %11, %12 : vector<1x1x256xf32>
    %cst_6 = arith.constant 9.99999997E-7 : f32
    %14 = vector.broadcast %cst_6 : f32 to vector<1x1x256xf32>
    %15 = arith.addf %13, %14 : vector<1x1x256xf32>
    %16 = math.rsqrt %15 : vector<1x1x256xf32>
    %c0_7 = arith.constant 0 : index
    %c0_8 = arith.constant 0 : index
    %c0_9 = arith.constant 0 : index
    %17 = vector.load %arg3[%c0_7, %c0_8, %c0_9] : memref<1x4x1xf32, #tpu.memory_space<vmem>>, vector<1x4x1xf32>
    %c0_10 = arith.constant 0 : index
    %c0_11 = arith.constant 0 : index
    %c0_12 = arith.constant 0 : index
    %18 = vector.load %arg4[%c0_10, %c0_11, %c0_12] : memref<1x4x1xf32, #tpu.memory_space<vmem>>, vector<1x4x1xf32>
    %19 = vector.broadcast %7 : vector<1x1x256xf32> to vector<1x4x256xf32>
    %20 = arith.subf %0, %19 : vector<1x4x256xf32>
    %21 = vector.broadcast %16 : vector<1x1x256xf32> to vector<1x4x256xf32>
    %22 = arith.mulf %20, %21 : vector<1x4x256xf32>
    %23 = vector.broadcast %17 : vector<1x4x1xf32> to vector<1x4x256xf32>
    %24 = arith.mulf %22, %23 : vector<1x4x256xf32>
    %25 = vector.broadcast %18 : vector<1x4x1xf32> to vector<1x4x256xf32>
    %26 = arith.addf %24, %25 : vector<1x4x256xf32>
    %c0_13 = arith.constant 0 : index
    %c0_14 = arith.constant 0 : index
    %c0_15 = arith.constant 0 : index
    %27 = vector.load %arg5[%c0_13, %c0_14, %c0_15] : memref<1x4x256xf32, #tpu.memory_space<vmem>>, vector<1x4x256xf32>
    tpu.vector_store %arg5[%c0_13, %c0_14, %c0_15], %26 {strides = array<i32>} : memref<1x4x256xf32, #tpu.memory_space<vmem>>, vector<1x4x256xf32>,
    return
  }
  func.func @transform_0(%arg0: i32, %arg1: i32) -> (i32, i32, i32) {
    %c0_i32 = arith.constant 0 : i32
    %c0_i32_0 = arith.constant 0 : i32
    return %arg0, %c0_i32, %arg1 : i32, i32, i32
  }
  func.func @transform_1(%arg0: i32, %arg1: i32) -> (i32, i32, i32) {
    %c0_i32 = arith.constant 0 : i32
    %c0_i32_0 = arith.constant 0 : i32
    %c0_i32_1 = arith.constant 0 : i32
    %c0_i32_2 = arith.constant 0 : i32
    return %c0_i32, %c0_i32_0, %c0_i32_1 : i32, i32, i32
  }
  func.func @transform_2(%arg0: i32, %arg1: i32) -> (i32, i32, i32) {
    %c0_i32 = arith.constant 0 : i32
    %c0_i32_0 = arith.constant 0 : i32
    %c0_i32_1 = arith.constant 0 : i32
    %c0_i32_2 = arith.constant 0 : i32
    return %c0_i32, %c0_i32_0, %c0_i32_1 : i32, i32, i32
  }
  func.func @transform_3(%arg0: i32, %arg1: i32) -> (i32, i32, i32) {
    %c0_i32 = arith.constant 0 : i32
    %c0_i32_0 = arith.constant 0 : i32
    return %arg0, %c0_i32, %arg1 : i32, i32, i32
  }
}

</mosaic_0001>

<llo_original>
// kernel: tpu_custom_call.1
$region0: #{tpu_custom_call.1}
  #allocation0 [shape = 'u32[]', space=smem, size = 0x4, offset = 0x4, fixed_abs, tag = 'smem constant byte address 0x4 - core index']
  #allocation1 [shape = 'u32[144,128]{1,0:T(1,128)}', space=vmem, size = 0x12000, scoped, tag = 'internal scratch']
  %s0 = inlined_call_operand.hbm [shape: f32[2,4,256], index: 0, kind: input, shape index: {}]
  %s1 = inlined_call_operand.vmem [shape: f32[1,4,1], index: 1, kind: input, shape index: {}]
  %s2 = inlined_call_operand.vmem [shape: f32[1,4,1], index: 2, kind: input, shape index: {}]
  %s3 = inlined_call_operand.hbm [shape: f32[2,4,256], index: 3, kind: output, shape index: {}]
  %s4 = sld [smem:[#allocation0]]
  $region49: #{tpu_custom_call.1} parent=0
    _
  %s6 = ssub.s32 1, %s4
  %s7 = scalar_select 0, %s6, %s4
  $region1: #{tpu_custom_call.1} parent=0
    #allocation2 [shape = 'u8[8192]{0}', space=vmem, size = 0x2000, scoped, tag = 'input window, operand 0']
    #allocation3 [shape = 's32[2]{0}', space=sflag, size = 0x8, scoped, tag = 'scoped memory for tpu_custom_call.1']
    #allocation4 [shape = 's32[2]{0}', space=sflag, size = 0x8, scoped, tag = 'scoped memory for tpu_custom_call.1']
    #allocation5 [shape = 'u8[8192]{0}', space=vmem, size = 0x2000, scoped, tag = 'output window, operand 0']
    %8 = vsyncpa [#allocation3], 0
    %s9 = scalar_lea.sflag [#allocation3], 1
    %10 = vsyncpa %s9, 0
    %11 = vsyncpa [#allocation4], 0
    %s12 = scalar_lea.sflag [#allocation4], 1
    %13 = vsyncpa %s12, 0
    loop: start=0, step=1, limit=4
    $region2: #{tpu_custom_call.1} parent=1 // loop_pre_header
      _
    $region3: #{tpu_custom_call.1} parent=1 // loop_header
      %s15 = sphi 0, %s19
      %p16 = scmp.ge.s32.totalorder %s15, 4
      %s22 = sphi 0, %s34
      %s23 = sphi 0, %s30
      %s24 = sphi 0, %s22
      %s25 = sphi 0, %s23
      %s26 = sphi 0, %s24
      %s27 = sphi 0, %s25
      %s39 = sphi 0, %s41
      %s42 = sphi 0, %s39
      %s43 = sphi 0, %s42
      %s59 = sphi 0, %s43
      %s63 = sphi 0, %s63
      %s65 = sphi 0, %s63
      %s66 = sphi 0, %s65
      %s80 = sphi 0, %s66
      %s84 = sphi 0, %s84
      %s86 = sphi 0, %s84
      %s87 = sphi 0, %s86
      %s101 = sphi 0, %s87
      %s109 = sphi 0, %s111
      %s112 = sphi 0, %s109
      %s113 = sphi 0, %s112
      %s129 = sphi 0, %s113
    $region4: #{tpu_custom_call.1} parent=1 // loop_header_branch
      %18 = sbr.rel (%p16) target = $region8
    $region5: #{tpu_custom_call.1} parent=1 // loop_body
      %s20 = ssub.s32 %s15, 1
      %s21 = ssub.s32 %s15, 2
      %s28 = sadd.s32 1, %s23
      %p29 = scmp.ge.s32.totalorder %s28, 1
      %s30 = scalar_select %p29, 0, %s28
      %s31 = sadd.s32 1, %s22
      %s32 = scalar_select %p29, %s31, %s22
      %p33 = scmp.ge.s32.totalorder %s32, 2
      %s34 = scalar_select %p33, 0, %s32
      %s35 = ssub.s32 %s22, %s34
      %s36 = ssub.s32 %s23, %s30
      %s37 = sor.u32 %s35, %s36
      %p38 = scmp.eq.s32.totalorder %s37, 0
      %s40 = sadd.s32 %s39, 1
      %s41 = scalar_select %p38, %s39, %s40
      %p44 = pneg %p38
      %p45 = scmp.eq.s32.totalorder %s15, 1
      %p46 = por %p44, %p45
      %p47 = scmp.ne.s32.totalorder %s39, %s42
      %p48 = scmp.eq.s32.totalorder %s15, 0
      %p49 = por %p47, %p48
      %p50 = scmp.ne.s32.totalorder %s39, %s42
      %p51 = scmp.eq.s32.totalorder %s20, 1
      %p52 = por %p50, %p51
      %p53 = scmp.ne.s32.totalorder %s42, %s43
      %p54 = scmp.eq.s32.totalorder %s20, 0
      %p55 = por %p53, %p54
      %p56 = scmp.ne.s32.totalorder %s42, %s43
      %p57 = scmp.eq.s32.totalorder %s21, 1
      %p58 = por %p56, %p57
      %p60 = scmp.ne.s32.totalorder %s43, %s59
      %p61 = scmp.eq.s32.totalorder %s21, 0
      %p62 = por %p60, %p61
      %s64 = sadd.s32 %s63, 1
      %p67 = scmp.eq.s32.totalorder %s15, 1
      %p68 = scmp.ne.s32.totalorder %s63, %s65
      %p69 = scmp.eq.s32.totalorder %s15, 0
      %p70 = por %p68, %p69
      %p71 = scmp.ne.s32.totalorder %s63, %s65
      %p72 = scmp.eq.s32.totalorder %s20, 1
      %p73 = por %p71, %p72
      %p74 = scmp.ne.s32.totalorder %s65, %s66
      %p75 = scmp.eq.s32.totalorder %s20, 0
      %p76 = por %p74, %p75
      %p77 = scmp.ne.s32.totalorder %s65, %s66
      %p78 = scmp.eq.s32.totalorder %s21, 1
      %p79 = por %p77, %p78
      %p81 = scmp.ne.s32.totalorder %s66, %s80
      %p82 = scmp.eq.s32.totalorder %s21, 0
      %p83 = por %p81, %p82
      %s85 = sadd.s32 %s84, 1
      %p88 = scmp.eq.s32.totalorder %s15, 1
      %p89 = scmp.ne.s32.totalorder %s84, %s86
      %p90 = scmp.eq.s32.totalorder %s15, 0
      %p91 = por %p89, %p90
      %p92 = scmp.ne.s32.totalorder %s84, %s86
      %p93 = scmp.eq.s32.totalorder %s20, 1
      %p94 = por %p92, %p93
      %p95 = scmp.ne.s32.totalorder %s86, %s87
      %p96 = scmp.eq.s32.totalorder %s20, 0
      %p97 = por %p95, %p96
      %p98 = scmp.ne.s32.totalorder %s86, %s87
      %p99 = scmp.eq.s32.totalorder %s21, 1
      %p100 = por %p98, %p99
      %p102 = scmp.ne.s32.totalorder %s87, %s101
      %p103 = scmp.eq.s32.totalorder %s21, 0
      %p104 = por %p102, %p103
      %s105 = ssub.s32 %s22, %s34
      %s106 = ssub.s32 %s23, %s30
      %s107 = sor.u32 %s105, %s106
      %p108 = scmp.eq.s32.totalorder %s107, 0
      %s110 = sadd.s32 %s109, 1
      %s111 = scalar_select %p108, %s109, %s110
      %p114 = pneg %p108
      %p115 = scmp.eq.s32.totalorder %s15, 1
      %p116 = por %p114, %p115
      %p117 = scmp.ne.s32.totalorder %s109, %s112
      %p118 = scmp.eq.s32.totalorder %s15, 0
      %p119 = por %p117, %p118
      %p120 = scmp.ne.s32.totalorder %s109, %s112
      %p121 = scmp.eq.s32.totalorder %s20, 1
      %p122 = por %p120, %p121
      %p123 = scmp.ne.s32.totalorder %s112, %s113
      %p124 = scmp.eq.s32.totalorder %s20, 0
      %p125 = por %p123, %p124
      %p126 = scmp.ne.s32.totalorder %s112, %s113
      %p127 = scmp.eq.s32.totalorder %s21, 1
      %p128 = por %p126, %p127
      %p130 = scmp.ne.s32.totalorder %s113, %s129
      %p131 = scmp.eq.s32.totalorder %s21, 0
      %p132 = por %p130, %p131
      %p133 = scmp.le.s32.totalorder 1, %s15
      %p134 = scmp.lt.s32.totalorder %s15, 3
      %p135 = pnand %p133, %p134
      %p136 = pneg %p135
      // Predicated region
      $region9: #{tpu_custom_call.1} parent=5 // pred_check
        _
      $region10: #{tpu_custom_call.1} parent=5 // pred_check_branch
        %138 = sbr.rel (%p135) target = $region12
      $region11: #{tpu_custom_call.1} parent=5 // pred_region
        %s139 = ssub.s32 %s15, 1
        // Predicated region
        $region13: #{tpu_custom_call.1} parent=11 // pred_check
          %p140 = pneg %p76
        $region14: #{tpu_custom_call.1} parent=11 // pred_check_branch
          %142 = sbr.rel (%p140) target = $region16
        $region15: #{tpu_custom_call.1} parent=11 // pred_region
          _
        $region16: #{tpu_custom_call.1} parent=11 // pred_fallthru
          _
        // Predicated region
        $region17: #{tpu_custom_call.1} parent=11 // pred_check
          %p143 = pneg %p97
        $region18: #{tpu_custom_call.1} parent=11 // pred_check_branch
          %145 = sbr.rel (%p143) target = $region20
        $region19: #{tpu_custom_call.1} parent=11 // pred_region
          _
        $region20: #{tpu_custom_call.1} parent=11 // pred_fallthru
          _
      $region12: #{tpu_custom_call.1} parent=5 // pred_fallthru
        _
      %p146 = scmp.lt.s32.totalorder %s15, 2
      // Predicated region
      $region21: #{tpu_custom_call.1} parent=5 // pred_check
        %p147 = pneg %p146
      $region22: #{tpu_custom_call.1} parent=5 // pred_check_branch
        %149 = sbr.rel (%p147) target = $region24
      $region23: #{tpu_custom_call.1} parent=5 // pred_region
        // Predicated region
        $region25: #{tpu_custom_call.1} parent=23 // pred_check
          %p150 = pneg %p49
        $region26: #{tpu_custom_call.1} parent=23 // pred_check_branch
          %152 = sbr.rel (%p150) target = $region28
        $region27: #{tpu_custom_call.1} parent=23 // pred_region
          %s153 = sand.u32 %s39, 1
          %s154 = scalar_lea.sflag [#allocation3], %s153
          %s155 = sand.u32 %s39, 1
          %s156 = smul.addr %s155, 8
          %s157 = scalar_lea.vmem [#allocation2], %s156
          %s158 = smul.u32 2, %s23
          %s160 = ssub.s32 128, 128
          %161 = vsyncadd %s154, %s160
          %s162 = smul.addr %s22, 2
          %s163 = sadd.s32 %s158, %s162
          %s164 = smul.addr %s163, 64
          %s165 = scalar_lea.hbm %s0, %s164
          %s167 = sshll.u32 %s157, 4
          %s168 = int_to_ptr.vmem [resolvable:$true] %s167
          %170 = dma.hbm_to_vmem [thread:$0]  %s165, 128, %s168, %s154
        $region28: #{tpu_custom_call.1} parent=23 // pred_fallthru
          _
      $region24: #{tpu_custom_call.1} parent=5 // pred_fallthru
        _
      %p171 = scmp.le.s32.totalorder 1, %s15
      %p172 = scmp.lt.s32.totalorder %s15, 3
      %p173 = pnand %p171, %p172
      %p174 = pneg %p173
      // Predicated region
      $region29: #{tpu_custom_call.1} parent=5 // pred_check
        _
      $region30: #{tpu_custom_call.1} parent=5 // pred_check_branch
        %176 = sbr.rel (%p173) target = $region32
      $region31: #{tpu_custom_call.1} parent=5 // pred_region
        %s177 = ssub.s32 %s15, 1
        %s178 = sand.u32 %s42, 1
        %s179 = scalar_lea.sflag [#allocation3], %s178
        %s180 = sand.u32 %s42, 1
        %s181 = smul.addr %s180, 8
        %s182 = scalar_lea.vmem [#allocation2], %s181
        // Predicated region
        $region33: #{tpu_custom_call.1} parent=31 // pred_check
          %p183 = pneg %p55
        $region34: #{tpu_custom_call.1} parent=31 // pred_check_branch
          %185 = sbr.rel (%p183) target = $region36
        $region35: #{tpu_custom_call.1} parent=31 // pred_region
          %186 = dma.done %s179, 128
        $region36: #{tpu_custom_call.1} parent=31 // pred_fallthru
          _
        %s187 = sand.u32 %s42, 1
        %s188 = scalar_lea.sflag [#allocation3], %s187
        %s189 = sand.u32 %s42, 1
        %s190 = smul.addr %s189, 8
        %s191 = scalar_lea.vmem [#allocation2], %s190
        %p192 = pneg %p55
        %p193 = pneg %p52
        %p194 = pneg %p76
        %p195 = pneg %p73
        %p196 = pneg %p97
        %p197 = pneg %p94
        %p198 = pneg %p125
        %p199 = pneg %p122
        %s200 = sand.u32 %s112, 1
        %s201 = scalar_lea.sflag [#allocation4], %s200
        %s202 = sand.u32 %s112, 1
        %s203 = smul.addr %s202, 8
        %s204 = scalar_lea.vmem [#allocation5], %s203
        %s205 = smul.u32 2, %s25
        %s206 = smul.u32 2, %s25
        %v207 = vld [vmem:[%s182] sm:$0xff]
        %v209 = vcombine.high %v207, %v207
        %vm211 = vcmask 1043456
        %v212 = vsel %vm211, %v207, 0.0
        %v213 = vrot.slane %v212, 4
        %v214 = vadd.f32 %v212, %v213
        %v215 = vrot.slane %v214, 2
        %v216 = vadd.f32 %v214, %v215
        %v217 = vrot.slane %v216, 1
        %v218 = vadd.f32 %v216, %v217
        %v219 = vsel %vm211, %v209, 0.0
        %v220 = vrot.slane %v219, 4
        %v221 = vadd.f32 %v219, %v220
        %v222 = vrot.slane %v221, 2
        %v223 = vadd.f32 %v221, %v222
        %v224 = vrot.slane %v223, 1
        %v225 = vadd.f32 %v223, %v224
        %v226 = vmul.f32 %v207, %v207
        %v228 = vcombine.high %v226, %v226
        %v230 = vsel %vm211, %v226, 0.0
        %v231 = vrot.slane %v230, 4
        %v232 = vadd.f32 %v230, %v231
        %v233 = vrot.slane %v232, 2
        %v234 = vadd.f32 %v232, %v233
        %v235 = vrot.slane %v234, 1
        %v236 = vadd.f32 %v234, %v235
        %v237 = vsel %vm211, %v228, 0.0
        %v238 = vrot.slane %v237, 4
        %v239 = vadd.f32 %v237, %v238
        %v240 = vrot.slane %v239, 2
        %v241 = vadd.f32 %v239, %v240
        %v242 = vrot.slane %v241, 1
        %v243 = vadd.f32 %v241, %v242
        %v244 = vmul.f32 %v218, 0.25
        %v245 = vmul.f32 %v225, 0.25
        %v246 = vmul.f32 %v236, 0.25
        %v247 = vmul.f32 %v243, 0.25
        %v248 = vmul.f32 %v244, %v244
        %v249 = vmul.f32 %v245, %v245
        %v250 = vsub.f32 %v246, %v248
        %v251 = vsub.f32 %v247, %v249
        %v252 = vmax.f32 %v250, 0.0
        %v253 = vmax.f32 %v251, 0.0
        %v254 = vadd.f32 %v252, 1e-06
        %v255 = vadd.f32 %v253, 1e-06
        %v256 = vrsqrt.pop %v254
        %v257 = vrsqrt.pop %v255
        %v258 = vld [vmem:[%s1] sm:$0xf]
        %v259 = vld [vmem:[%s2] sm:$0xf]
        %v262 = vcombine.low %v244, %v245
        %v264 = vsub.f32 %v207, %v262
        %v267 = vcombine.low %v256, %v257
        %v269 = vmul.f32 %v264, %v267
        %271 = vset.pattern.permute.xlu0 0
        %272 = vperm.xlu0 %271, %v258
        %v273 = vpop.permute.xlu0 %272
        %v275 = vunpack.c.l.s4 839922192
        %v276 = vunpack.c.0.s8 %v275
        %v277 = vlaneseq
        %v278 = vshrl.u32 %v277, 7
        %v279 = vsub.s32 %v276, %v278
        %v280 = vrot.slane %v273, %v279
        %v282 = vmul.f32 %v269, %v280
        %284 = vset.pattern.permute.xlu0 0
        %285 = vperm.xlu0 %284, %v259
        %v286 = vpop.permute.xlu0 %285
        %v288 = vunpack.c.l.s4 839922192
        %v289 = vunpack.c.0.s8 %v288
        %v290 = vlaneseq
        %v291 = vshrl.u32 %v290, 7
        %v292 = vsub.s32 %v289, %v291
        %v293 = vrot.slane %v286, %v292
        %v295 = vadd.f32 %v282, %v293
        %296 = vst [vmem:[%s204] sm:$0xff] %v295
        %s297 = sand.u32 %s112, 1
        %s298 = scalar_lea.sflag [#allocation4], %s297
        %s299 = sand.u32 %s112, 1
        %s300 = smul.addr %s299, 8
        %s301 = scalar_lea.vmem [#allocation5], %s300
        // Predicated region
        $region37: #{tpu_custom_call.1} parent=31 // pred_check
          %p302 = pneg %p122
        $region38: #{tpu_custom_call.1} parent=31 // pred_check_branch
          %304 = sbr.rel (%p302) target = $region40
        $region39: #{tpu_custom_call.1} parent=31 // pred_region
          %s305 = smul.u32 2, %s25
          %s307 = ssub.s32 128, 128
          %308 = vsyncadd %s298, %s307
          %s309 = smul.addr %s24, 2
          %s310 = sadd.s32 %s305, %s309
          %s311 = smul.addr %s310, 64
          %s312 = scalar_lea.hbm %s3, %s311
          %s314 = sshll.u32 %s301, 4
          %s315 = int_to_ptr.vmem [resolvable:$true] %s314
          %317 = dma.vmem_to_hbm [thread:$0]  %s315, 128, %s312, %s298
        $region40: #{tpu_custom_call.1} parent=31 // pred_fallthru
          _
      $region32: #{tpu_custom_call.1} parent=5 // pred_fallthru
        _
      %p318 = scmp.le.s32.totalorder 2, %s15
      // Predicated region
      $region41: #{tpu_custom_call.1} parent=5 // pred_check
        %p319 = pneg %p318
      $region42: #{tpu_custom_call.1} parent=5 // pred_check_branch
        %321 = sbr.rel (%p319) target = $region44
      $region43: #{tpu_custom_call.1} parent=5 // pred_region
        %s322 = ssub.s32 %s15, 2
        // Predicated region
        $region45: #{tpu_custom_call.1} parent=43 // pred_check
          %p323 = pneg %p128
        $region46: #{tpu_custom_call.1} parent=43 // pred_check_branch
          %325 = sbr.rel (%p323) target = $region48
        $region47: #{tpu_custom_call.1} parent=43 // pred_region
          %s326 = sand.u32 %s113, 1
          %s327 = scalar_lea.sflag [#allocation4], %s326
          %s328 = sand.u32 %s113, 1
          %s329 = smul.addr %s328, 8
          %s330 = scalar_lea.vmem [#allocation5], %s329
          %331 = dma.done %s327, 128
        $region48: #{tpu_custom_call.1} parent=43 // pred_fallthru
          _
      $region44: #{tpu_custom_call.1} parent=5 // pred_fallthru
        _
    $region6: #{tpu_custom_call.1} parent=1 // loop_footer
      %s19 = sadd.s32 1, %s15
    $region7: #{tpu_custom_call.1} parent=1 // loop_footer_branch
      %14 = sbr.rel target = $region3
    $region8: #{tpu_custom_call.1} parent=1 // loop_exit
      _
    %332 = vsyncpa [#allocation3], 1
    %s333 = scalar_lea.sflag [#allocation3], 1
    %334 = vsyncpa %s333, 1
    %335 = vsyncpa [#allocation4], 1
    %s336 = scalar_lea.sflag [#allocation4], 1
    %337 = vsyncpa %s336, 1

</llo_original>
